<compile_context>
chip_gen: v7x
topology: tpu7x:2x2x1
jax: 0.10.0
libtpu: 0.0.40
codegen_flags: <defaults>
</compile_context>

<pallas_src>
import jax
import jax.numpy as jnp
from jax.experimental import pallas as pl
from jax.experimental.pallas import tpu as pltpu


STATE_SIZE = 4     # CartPole-v1 observation dim
ACTION_SIZE = 2    # CartPole-v1 action dim
HIDDEN = 64

HIDDEN_PAD = 128   # lane-dense hidden width
ACTION_PAD = 128   # lane-dense output width


def _round_up(n, m):
    return ((n + m - 1) // m) * m


def qnetwork_kernel(x_ref, w1_ref, b1_ref, w2_ref, b2_ref, o_ref):
    # x:  [TB, S]  bf16   w1: [S, Hp]  bf16   b1: [1, Hp] f32
    # w2: [Hp, Ap] bf16   b2: [1, Ap]  f32    o:  [TB, Ap] f32
    x = x_ref[...]
    # First matmul on the MXU, f32 accumulation; bias add + ReLU in f32 on VPU.
    h = jnp.dot(x, w1_ref[...], preferred_element_type=jnp.float32) + b1_ref[...]
    h = jnp.maximum(h, 0.0)
    # Second matmul: bf16 operands into the MXU, keep f32 accumulation.
    q = jnp.dot(h.astype(w2_ref.dtype), w2_ref[...],
                preferred_element_type=jnp.float32) + b2_ref[...]
    o_ref[...] = q.astype(o_ref.dtype)


def qnetwork_forward(x, w1, b1, w2, b2, *, compute_dtype=jnp.bfloat16):
    """x: [B, STATE_SIZE] f32.
       w1: [STATE_SIZE, HIDDEN], b1: [HIDDEN], w2: [HIDDEN, ACTION_SIZE], b2: [ACTION_SIZE]
       (weights stored [in, out], i.e. transpose of PyTorch's [out, in]).
       Returns [B, ACTION_SIZE] f32."""
    B, S = x.shape
    assert S == STATE_SIZE

    # --- zero-pad feature axes to 128 lanes (unmasked stores, full MXU width).
    w1p = jnp.zeros((STATE_SIZE, HIDDEN_PAD), jnp.float32).at[:, :HIDDEN].set(w1)
    b1p = jnp.zeros((1, HIDDEN_PAD), jnp.float32).at[:, :HIDDEN].set(b1.reshape(1, -1))
    w2p = jnp.zeros((HIDDEN_PAD, ACTION_PAD), jnp.float32).at[:HIDDEN, :ACTION_SIZE].set(w2)
    b2p = jnp.zeros((1, ACTION_PAD), jnp.float32).at[:, :ACTION_SIZE].set(b2.reshape(1, -1))

    # bf16 MXU operands; biases stay f32 (added post-accumulation in f32).
    x_c = x.astype(compute_dtype)
    w1p = w1p.astype(compute_dtype)
    w2p = w2p.astype(compute_dtype)

    # --- batch tiling: weights resident in VMEM (constant index_maps).
    TB = 128 if B >= 128 else _round_up(B, 8)
    B_pad = _round_up(B, TB)
    if B_pad != B:
        x_c = jnp.pad(x_c, ((0, B_pad - B), (0, 0)))
    n_tiles = B_pad // TB
    # VMEM footprint per tile is a few hundred KiB at most — far below the
    # 64 MiB (v7x) / 128 MiB (v5e/v6e) ceilings, so no further capping needed.

    flops = 2 * B_pad * (STATE_SIZE * HIDDEN_PAD + HIDDEN_PAD * ACTION_PAD)
    bytes_accessed = (
        x_c.size * x_c.dtype.itemsize
        + w1p.size * w1p.dtype.itemsize + b1p.size * 4
        + w2p.size * w2p.dtype.itemsize + b2p.size * 4
        + B_pad * ACTION_PAD * 4
    )

    out = pl.pallas_call(
        qnetwork_kernel,
        out_shape=jax.ShapeDtypeStruct((B_pad, ACTION_PAD), jnp.float32),
        grid=(n_tiles,),
        in_specs=[
            pl.BlockSpec((TB, STATE_SIZE), lambda i: (i, 0)),
            pl.BlockSpec((STATE_SIZE, HIDDEN_PAD), lambda i: (0, 0)),
            pl.BlockSpec((1, HIDDEN_PAD), lambda i: (0, 0)),
            pl.BlockSpec((HIDDEN_PAD, ACTION_PAD), lambda i: (0, 0)),
            pl.BlockSpec((1, ACTION_PAD), lambda i: (0, 0)),
        ],
        out_specs=pl.BlockSpec((TB, ACTION_PAD), lambda i: (i, 0)),
        compiler_params=pltpu.CompilerParams(
            dimension_semantics=("parallel",)),
        cost_estimate=pl.CostEstimate(
            flops=flops, transcendentals=0, bytes_accessed=bytes_accessed),
    )(x_c, w1p, b1p, w2p, b2p)

    return out[:B, :ACTION_SIZE]


def init_params(key):
    """Deterministic init mirroring nn.Linear's default U(-1/sqrt(fan_in), ...)."""
    k1, k2, k3, k4 = jax.random.split(key, 4)
    bound1 = 1.0 / jnp.sqrt(STATE_SIZE)
    bound2 = 1.0 / jnp.sqrt(HIDDEN)
    w1 = jax.random.uniform(k1, (STATE_SIZE, HIDDEN), jnp.float32, -bound1, bound1)
    b1 = jax.random.uniform(k2, (HIDDEN,), jnp.float32, -bound1, bound1)
    w2 = jax.random.uniform(k3, (HIDDEN, ACTION_SIZE), jnp.float32, -bound2, bound2)
    b2 = jax.random.uniform(k4, (ACTION_SIZE,), jnp.float32, -bound2, bound2)
    return w1, b1, w2, b2


def qnetwork_reference(x, w1, b1, w2, b2, compute_dtype=jnp.bfloat16):
    """Pure-JAX reference following the same bf16-operand / f32-accum path."""
    h = jnp.dot(x.astype(compute_dtype), w1.astype(compute_dtype),
                preferred_element_type=jnp.float32) + b1.reshape(1, -1)
    h = jnp.maximum(h, 0.0)
    q = jnp.dot(h.astype(compute_dtype), w2.astype(compute_dtype),
                preferred_element_type=jnp.float32) + b2.reshape(1, -1)
    return q


def qnetwork_reference_f32(x, w1, b1, w2, b2):
    h = jnp.maximum(x @ w1 + b1.reshape(1, -1), 0.0)
    return h @ w2 + b2.reshape(1, -1)


if __name__ == "__main__":
    key = jax.random.PRNGKey(0)
    k_params, k_x1, k_x2 = jax.random.split(key, 3)
    w1, b1, w2, b2 = init_params(k_params)

    # Small batch (single tile).
    x_small = jax.random.normal(k_x1, (8, STATE_SIZE), jnp.float32)
    q_small = jax.block_until_ready(qnetwork_forward(x_small, w1, b1, w2, b2))
    assert q_small.shape == (8, ACTION_SIZE)
    ref_small = qnetwork_reference(x_small, w1, b1, w2, b2)
    assert jnp.allclose(q_small, ref_small, atol=1e-3, rtol=1e-3), "mismatch (small batch)"
    assert jnp.allclose(q_small, qnetwork_reference_f32(x_small, w1, b1, w2, b2),
                        atol=1e-1), "bf16 drift too large (small batch)"

    # Larger batch exercises the batch grid + padding path (TB=128, 2 tiles).
    x_big = jax.random.normal(k_x2, (130, STATE_SIZE), jnp.float32)
    q_big = jax.block_until_ready(qnetwork_forward(x_big, w1, b1, w2, b2))
    assert q_big.shape == (130, ACTION_SIZE)
    ref_big = qnetwork_reference(x_big, w1, b1, w2, b2)
    assert jnp.allclose(q_big, ref_big, atol=1e-3, rtol=1e-3), "mismatch (big batch)"
    assert jnp.allclose(q_big, qnetwork_reference_f32(x_big, w1, b1, w2, b2),
                        atol=1e-1), "bf16 drift too large (big batch)"

    print("KERNEL_OK")
</pallas_src>

<mosaic_0001>
module attributes {stable_mosaic.version = 11 : i64} {
  func.func @qnetwork_kernel(%arg0: i32, %arg1: memref<8x4xbf16, #tpu.memory_space<vmem>>, %arg2: memref<4x128xbf16, #tpu.memory_space<vmem>>, %arg3: memref<1x128xf32, #tpu.memory_space<vmem>>, %arg4: memref<128x128xbf16, #tpu.memory_space<vmem>>, %arg5: memref<1x128xf32, #tpu.memory_space<vmem>>, %arg6: memref<8x128xf32, #tpu.memory_space<vmem>>) attributes {dimension_semantics = [#tpu.dimension_semantics<parallel>], iteration_bounds = array<i64: 1>, scalar_prefetch = 0 : i64, scratch_operands = 0 : i64, tpu.core_type = #tpu.core_type<tc>, window_params = [{transform_indices = @transform_0, window_bounds = array<i64: 8, 4>}, {pipeline_mode = #tpu.pipeline_mode<synchronous>, transform_indices = @transform_1, window_bounds = array<i64: 4, 128>}, {pipeline_mode = #tpu.pipeline_mode<synchronous>, transform_indices = @transform_2, window_bounds = array<i64: 1, 128>}, {pipeline_mode = #tpu.pipeline_mode<synchronous>, transform_indices = @transform_3, window_bounds = array<i64: 128, 128>}, {pipeline_mode = #tpu.pipeline_mode<synchronous>, transform_indices = @transform_4, window_bounds = array<i64: 1, 128>}, {transform_indices = @transform_5, window_bounds = array<i64: 8, 128>}]} {
    %c0 = arith.constant 0 : index
    %c0_0 = arith.constant 0 : index
    %0 = vector.load %arg1[%c0, %c0_0] : memref<8x4xbf16, #tpu.memory_space<vmem>>, vector<8x4xbf16>
    %c0_1 = arith.constant 0 : index
    %c0_2 = arith.constant 0 : index
    %1 = vector.load %arg2[%c0_1, %c0_2] : memref<4x128xbf16, #tpu.memory_space<vmem>>, vector<4x128xbf16>
    %cst = arith.constant dense<0.000000e+00> : vector<8x128xf32>
    %2 = tpu.matmul %0, %1, %cst {dimension_numbers = #tpu.dot_dimension_numbers<[1], [0], [0], [1], [0, 0, 1, 1], [], []>} : vector<8x4xbf16>, vector<4x128xbf16>, vector<8x128xf32> -> vector<8x128xf32>
    %c0_3 = arith.constant 0 : index
    %c0_4 = arith.constant 0 : index
    %3 = vector.load %arg3[%c0_3, %c0_4] : memref<1x128xf32, #tpu.memory_space<vmem>>, vector<1x128xf32>
    %4 = vector.broadcast %3 : vector<1x128xf32> to vector<8x128xf32>
    %5 = arith.addf %2, %4 : vector<8x128xf32>
    %cst_5 = arith.constant 0.000000e+00 : f32
    %6 = vector.broadcast %cst_5 : f32 to vector<8x128xf32>
    %7 = arith.maximumf %5, %6 : vector<8x128xf32>
    %8 = arith.truncf %7 : vector<8x128xf32> to vector<8x128xbf16>
    %c0_6 = arith.constant 0 : index
    %c0_7 = arith.constant 0 : index
    %9 = vector.load %arg4[%c0_6, %c0_7] : memref<128x128xbf16, #tpu.memory_space<vmem>>, vector<128x128xbf16>
    %cst_8 = arith.constant dense<0.000000e+00> : vector<8x128xf32>
    %10 = tpu.matmul %8, %9, %cst_8 {dimension_numbers = #tpu.dot_dimension_numbers<[1], [0], [0], [1], [0, 0, 1, 1], [], []>} : vector<8x128xbf16>, vector<128x128xbf16>, vector<8x128xf32> -> vector<8x128xf32>
    %c0_9 = arith.constant 0 : index
    %c0_10 = arith.constant 0 : index
    %11 = vector.load %arg5[%c0_9, %c0_10] : memref<1x128xf32, #tpu.memory_space<vmem>>, vector<1x128xf32>
    %12 = vector.broadcast %11 : vector<1x128xf32> to vector<8x128xf32>
    %13 = arith.addf %10, %12 : vector<8x128xf32>
    %c0_11 = arith.constant 0 : index
    %c0_12 = arith.constant 0 : index
    %14 = vector.load %arg6[%c0_11, %c0_12] : memref<8x128xf32, #tpu.memory_space<vmem>>, vector<8x128xf32>
    tpu.vector_store %arg6[%c0_11, %c0_12], %13 {strides = array<i32>} : memref<8x128xf32, #tpu.memory_space<vmem>>, vector<8x128xf32>,
    return
  }
  func.func @transform_0(%arg0: i32) -> (i32, i32) {
    %c0_i32 = arith.constant 0 : i32
    %c0_i32_0 = arith.constant 0 : i32
    return %arg0, %c0_i32 : i32, i32
  }
  func.func @transform_1(%arg0: i32) -> (i32, i32) {
    %c0_i32 = arith.constant 0 : i32
    %c0_i32_0 = arith.constant 0 : i32
    %c0_i32_1 = arith.constant 0 : i32
    return %c0_i32, %c0_i32_0 : i32, i32
  }
  func.func @transform_2(%arg0: i32) -> (i32, i32) {
    %c0_i32 = arith.constant 0 : i32
    %c0_i32_0 = arith.constant 0 : i32
    %c0_i32_1 = arith.constant 0 : i32
    return %c0_i32, %c0_i32_0 : i32, i32
  }
  func.func @transform_3(%arg0: i32) -> (i32, i32) {
    %c0_i32 = arith.constant 0 : i32
    %c0_i32_0 = arith.constant 0 : i32
    %c0_i32_1 = arith.constant 0 : i32
    return %c0_i32, %c0_i32_0 : i32, i32
  }
  func.func @transform_4(%arg0: i32) -> (i32, i32) {
    %c0_i32 = arith.constant 0 : i32
    %c0_i32_0 = arith.constant 0 : i32
    %c0_i32_1 = arith.constant 0 : i32
    return %c0_i32, %c0_i32_0 : i32, i32
  }
  func.func @transform_5(%arg0: i32) -> (i32, i32) {
    %c0_i32 = arith.constant 0 : i32
    %c0_i32_0 = arith.constant 0 : i32
    return %arg0, %c0_i32 : i32, i32
  }
}

</mosaic_0001>

<llo_original>
// kernel: tpu_custom_call.1
$region0: #{tpu_custom_call.1}
  #allocation0 [shape = 'u32[]', space=smem, size = 0x4, offset = 0x4, fixed_abs, tag = 'smem constant byte address 0x4 - core index']
  #allocation1 [shape = 'u32[144,128]{1,0:T(1,128)}', space=vmem, size = 0x12000, scoped, tag = 'internal scratch']
  %s0 = inlined_call_operand.vmem [shape: bf16[8,4], index: 0, kind: input, shape index: {}]
  %s1 = inlined_call_operand.vmem [shape: bf16[4,128], index: 1, kind: input, shape index: {}]
  %s2 = inlined_call_operand.vmem [shape: f32[1,128], index: 2, kind: input, shape index: {}]
  %s3 = inlined_call_operand.hbm [shape: bf16[128,128], index: 3, kind: input, shape index: {}]
  %s4 = inlined_call_operand.vmem [shape: f32[1,128], index: 4, kind: input, shape index: {}]
  %s5 = inlined_call_operand.hbm [shape: f32[8,128], index: 5, kind: output, shape index: {}]
  %s6 = sld [smem:[#allocation0]]
  $region34: #{tpu_custom_call.1} parent=0
    _
  %s8 = ssub.s32 1, %s6
  %s9 = scalar_select 0, %s8, %s6
  $region1: #{tpu_custom_call.1} parent=0
    #allocation2 [shape = 'u8[32768]{0}', space=vmem, size = 0x8000, scoped, tag = 'input window, operand 3, single buffered']
    #allocation3 [shape = 's32[1]{0}', space=sflag, size = 0x4, scoped, tag = 'scoped memory for tpu_custom_call.1']
    #allocation4 [shape = 's32[1]{0}', space=sflag, size = 0x4, scoped, tag = 'scoped memory for tpu_custom_call.1']
    #allocation5 [shape = 'u8[4096]{0}', space=vmem, size = 0x1000, scoped, tag = 'output window, operand 0, single buffered']
    %10 = vsyncpa [#allocation3], 0
    %11 = vsyncpa [#allocation4], 0
    // Predicated region
    $region2: #{tpu_custom_call.1} parent=1 // pred_check
      _
    $region3: #{tpu_custom_call.1} parent=1 // pred_check_branch
      %13 = sbr.rel (0) target = $region5
    $region4: #{tpu_custom_call.1} parent=1 // pred_region
      _
    $region5: #{tpu_custom_call.1} parent=1 // pred_fallthru
      _
    // Predicated region
    $region6: #{tpu_custom_call.1} parent=1 // pred_check
      _
    $region7: #{tpu_custom_call.1} parent=1 // pred_check_branch
      %15 = sbr.rel (0) target = $region9
    $region8: #{tpu_custom_call.1} parent=1 // pred_region
      _
    $region9: #{tpu_custom_call.1} parent=1 // pred_fallthru
      _
    // Predicated region
    $region10: #{tpu_custom_call.1} parent=1 // pred_check
      _
    $region11: #{tpu_custom_call.1} parent=1 // pred_check_branch
      %17 = sbr.rel (0) target = $region13
    $region12: #{tpu_custom_call.1} parent=1 // pred_region
      _
    $region13: #{tpu_custom_call.1} parent=1 // pred_fallthru
      _
    // Predicated region
    $region14: #{tpu_custom_call.1} parent=1 // pred_check
      _
    $region15: #{tpu_custom_call.1} parent=1 // pred_check_branch
      %19 = sbr.rel (0) target = $region17
    $region16: #{tpu_custom_call.1} parent=1 // pred_region
      %s21 = ssub.s32 1024, 1024
      %22 = vsyncadd [#allocation3], %s21
      %s23 = sshll.u32 [#allocation2], 4
      %s24 = int_to_ptr.vmem [resolvable:$true] %s23
      %29 = dma.hbm_to_vmem [thread:$0]  %s3, 1024, %s24, [#allocation3], 64, 64, 4
    $region17: #{tpu_custom_call.1} parent=1 // pred_fallthru
      _
    // Predicated region
    $region18: #{tpu_custom_call.1} parent=1 // pred_check
      _
    $region19: #{tpu_custom_call.1} parent=1 // pred_check_branch
      %31 = sbr.rel (0) target = $region21
    $region20: #{tpu_custom_call.1} parent=1 // pred_region
      _
    $region21: #{tpu_custom_call.1} parent=1 // pred_fallthru
      _
    // Predicated region
    $region22: #{tpu_custom_call.1} parent=1 // pred_check
      _
    $region23: #{tpu_custom_call.1} parent=1 // pred_check_branch
      %33 = sbr.rel (0) target = $region25
    $region24: #{tpu_custom_call.1} parent=1 // pred_region
      %34 = dma.done [#allocation3], 1024
    $region25: #{tpu_custom_call.1} parent=1 // pred_fallthru
      _
    %v36 = vld [vmem:[%s0] sm:$0xf]
    %v37 = vld [vmem:[%s1] sm:$0x3]
    %v38 = vld [vmem:[%s2] sm:$0x1]
    %v40 = vlaneseq
    %v41 = vshrl.u32 %v40, 7
    %v42 = vsub.s32 0, %v41
    %v43 = vrot.slane %v38, %v42
    %vm45 = vcmask 31744
    %v47 = vsel %vm45, %v36, 0
    %vm49 = vcmask 1041408
    %v51 = vsel %vm49, %v37, 0
    %53 = vmatprep.subr.bf16.mxu0 0
    %54 = vmatpush1.bf16.msra.mxu0 %v51
    %55 = vmatprep.subr.bf16.mxu0 0
    %56 = vmatpush1.bf16.msra.mxu0 0
    %57 = vmatprep.subr.bf16.mxu0 0
    %58 = vmatpush1.bf16.msra.mxu0 0
    %59 = vmatprep.subr.bf16.mxu0 0
    %60 = vmatpush1.bf16.msra.mxu0 0
    %61 = vmatprep.subr.bf16.mxu0 0
    %62 = vmatpush1.bf16.msra.mxu0 0
    %63 = vmatprep.subr.bf16.mxu0 0
    %64 = vmatpush1.bf16.msra.mxu0 0
    %65 = vmatprep.subr.bf16.mxu0 0
    %66 = vmatpush1.bf16.msra.mxu0 0
    %67 = vmatprep.subr.bf16.mxu0 0
    %68 = vmatpush1.bf16.msra.mxu0 0
    %69 = vmatprep.subr.bf16.mxu0 0
    %70 = vmatpush1.bf16.msra.mxu0 0
    %71 = vmatprep.subr.bf16.mxu0 0
    %72 = vmatpush1.bf16.msra.mxu0 0
    %73 = vmatprep.subr.bf16.mxu0 0
    %74 = vmatpush1.bf16.msra.mxu0 0
    %75 = vmatprep.subr.bf16.mxu0 0
    %76 = vmatpush1.bf16.msra.mxu0 0
    %77 = vmatprep.subr.bf16.mxu0 0
    %78 = vmatpush1.bf16.msra.mxu0 0
    %79 = vmatprep.subr.bf16.mxu0 0
    %80 = vmatpush1.bf16.msra.mxu0 0
    %81 = vmatprep.subr.bf16.mxu0 0
    %82 = vmatpush1.bf16.msra.mxu0 0
    %83 = vmatprep.subr.bf16.mxu0 0
    %84 = vmatpush1.bf16.msra.mxu0 0
    %85 = vmatprep.mubr.bf16.mxu0 0
    %86 = vmatmul.mubr.bf16.gmra.mrb[0].mxu0 %v47
    %v87 = vpop.f32.mrb[0].mxu0
    %v88 = vadd.f32 %v43, %v87
    %v89 = vpop.f32.mrb[0].mxu0
    %v90 = vpop.f32.mrb[0].mxu0
    %v91 = vpop.f32.mrb[0].mxu0
    %92 = vdwg.mxu0
    %v93 = vmax.f32 %v88, 0.0
    %v94 = vpack.c.bf16 %v93, %v93
    %v95 = vld [vmem:[#allocation2] sm:$0xf]
    %v96 = vld [vmem:[#allocation2 + $0x4] sm:$0xf]
    %v97 = vld [vmem:[#allocation2 + $0x8] sm:$0xf]
    %v98 = vld [vmem:[#allocation2 + $0xc] sm:$0xf]
    %v99 = vld [vmem:[#allocation2 + $0x10] sm:$0xf]
    %v100 = vld [vmem:[#allocation2 + $0x14] sm:$0xf]
    %v101 = vld [vmem:[#allocation2 + $0x18] sm:$0xf]
    %v102 = vld [vmem:[#allocation2 + $0x1c] sm:$0xf]
    %v103 = vld [vmem:[#allocation2 + $0x20] sm:$0xf]
    %v104 = vld [vmem:[#allocation2 + $0x24] sm:$0xf]
    %v105 = vld [vmem:[#allocation2 + $0x28] sm:$0xf]
    %v106 = vld [vmem:[#allocation2 + $0x2c] sm:$0xf]
    %v107 = vld [vmem:[#allocation2 + $0x30] sm:$0xf]
    %v108 = vld [vmem:[#allocation2 + $0x34] sm:$0xf]
    %v109 = vld [vmem:[#allocation2 + $0x38] sm:$0xf]
    %v110 = vld [vmem:[#allocation2 + $0x3c] sm:$0xf]
    %v111 = vld [vmem:[%s4] sm:$0x1]
    %v113 = vlaneseq
    %v114 = vshrl.u32 %v113, 7
    %v115 = vsub.s32 0, %v114
    %v116 = vrot.slane %v111, %v115
    %v134 = vunpack.c.l.b16 %v95
    %v135 = vunpack.c.l.b16 %v96
    %v136 = vunpack.c.l.b16 %v97
    %v137 = vunpack.c.l.b16 %v98
    %v138 = vunpack.c.l.b16 %v99
    %v139 = vunpack.c.l.b16 %v100
    %v140 = vunpack.c.l.b16 %v101
    %v141 = vunpack.c.l.b16 %v102
    %v142 = vunpack.c.l.b16 %v103
    %v143 = vunpack.c.l.b16 %v104
    %v144 = vunpack.c.l.b16 %v105
    %v145 = vunpack.c.l.b16 %v106
    %v146 = vunpack.c.l.b16 %v107
    %v147 = vunpack.c.l.b16 %v108
    %v148 = vunpack.c.l.b16 %v109
    %v149 = vunpack.c.l.b16 %v110
    %v150 = vpack.c.b16 %v135, %v134
    %v151 = vpack.c.b16 %v137, %v136
    %v152 = vpack.c.b16 %v139, %v138
    %v153 = vpack.c.b16 %v141, %v140
    %v154 = vpack.c.b16 %v143, %v142
    %v155 = vpack.c.b16 %v145, %v144
    %v156 = vpack.c.b16 %v147, %v146
    %v157 = vpack.c.b16 %v149, %v148
    %166 = vmatprep.subr.bf16.mxu0 0
    %167 = vmatpush1.bf16.msra.mxu0 %v150
    %168 = vmatprep.subr.bf16.mxu0 0
    %169 = vmatpush1.bf16.msra.mxu0 %v151
    %170 = vmatprep.subr.bf16.mxu0 0
    %171 = vmatpush1.bf16.msra.mxu0 %v152
    %172 = vmatprep.subr.bf16.mxu0 0
    %173 = vmatpush1.bf16.msra.mxu0 %v153
    %174 = vmatprep.subr.bf16.mxu0 0
    %175 = vmatpush1.bf16.msra.mxu0 %v154
    %176 = vmatprep.subr.bf16.mxu0 0
    %177 = vmatpush1.bf16.msra.mxu0 %v155
    %178 = vmatprep.subr.bf16.mxu0 0
    %179 = vmatpush1.bf16.msra.mxu0 %v156
    %180 = vmatprep.subr.bf16.mxu0 0
    %181 = vmatpush1.bf16.msra.mxu0 %v157
    %182 = vmatprep.subr.bf16.mxu0 0
    %183 = vmatpush1.bf16.msra.mxu0 0
    %184 = vmatprep.subr.bf16.mxu0 0
    %185 = vmatpush1.bf16.msra.mxu0 0
    %186 = vmatprep.subr.bf16.mxu0 0
    %187 = vmatpush1.bf16.msra.mxu0 0
    %188 = vmatprep.subr.bf16.mxu0 0
    %189 = vmatpush1.bf16.msra.mxu0 0
    %190 = vmatprep.subr.bf16.mxu0 0
    %191 = vmatpush1.bf16.msra.mxu0 0
    %192 = vmatprep.subr.bf16.mxu0 0
    %193 = vmatpush1.bf16.msra.mxu0 0
    %194 = vmatprep.subr.bf16.mxu0 0
    %195 = vmatpush1.bf16.msra.mxu0 0
    %196 = vmatprep.subr.bf16.mxu0 0
    %197 = vmatpush1.bf16.msra.mxu0 0
    %198 = vmatprep.mubr.bf16.mxu0 0
    %199 = vmatmul.mubr.bf16.gmra.mrb[0].mxu0 %v94
    %v200 = vpop.f32.mrb[0].mxu0
    %v201 = vadd.f32 %v116, %v200
    %v202 = vpop.f32.mrb[0].mxu0
    %v203 = vpop.f32.mrb[0].mxu0
    %v204 = vpop.f32.mrb[0].mxu0
    %205 = vdwg.mxu0
    %206 = vst [vmem:[#allocation5] sm:$0xff] %v201
    // Predicated region
    $region26: #{tpu_custom_call.1} parent=1 // pred_check
      _
    $region27: #{tpu_custom_call.1} parent=1 // pred_check_branch
      %208 = sbr.rel (0) target = $region29
    $region28: #{tpu_custom_call.1} parent=1 // pred_region
      %s210 = ssub.s32 128, 128
      %211 = vsyncadd [#allocation4], %s210
      %s213 = sshll.u32 [#allocation5], 4
      %s214 = int_to_ptr.vmem [resolvable:$true] %s213
      %216 = dma.vmem_to_hbm [thread:$0]  %s214, 128, %s5, [#allocation4]
    $region29: #{tpu_custom_call.1} parent=1 // pred_fallthru
      _
    // Predicated region
    $region30: #{tpu_custom_call.1} parent=1 // pred_check
      _
    $region31: #{tpu_custom_call.1} parent=1 // pred_check_branch
      %218 = sbr.rel (0) target = $region33
    $region32: #{tpu_custom_call.1} parent=1 // pred_region
      %219 = dma.done [#allocation4], 128
    $region33: #{tpu_custom_call.1} parent=1 // pred_fallthru
      _
    %220 = vsyncpa [#allocation3], 1
    %221 = vsyncpa [#allocation4], 1

</llo_original>
